<compile_context>
chip_gen: v5e
topology: v5e:2x2
jax: 0.10.0
libtpu: 0.0.40
codegen_flags: <defaults>
</compile_context>

<pallas_src>
import functools

import jax
import jax.numpy as jnp
from jax import lax
from jax.experimental import pallas as pl
from jax.experimental.pallas import tpu as pltpu

LANES = 128


def _default_tile_rows():
    """Generation-aware tile height (rows of 128 lanes per block)."""
    try:
        kind = jax.devices()[0].device_kind.lower()
    except Exception:
        kind = ""
    # v6e / v7x: 32 MiB default scoped VMEM -> 4 MiB f32 blocks (2 inputs x
    # 2 buffers = 16 MiB) amortize the ~0.35 us per-step overhead.
    if ("v6" in kind) or ("v7" in kind):
        return 8192
    # v5e (16 MiB default scoped VMEM) and unknown chips: 2 MiB blocks.
    return 4096


def _spec_pow(x, gamma: float):
    """x ** gamma, specialized to multiplies for small integer gamma."""
    g = float(gamma)
    if g.is_integer() and 0 <= int(g) <= 8:
        n = int(g)
        if n == 0:
            return jnp.ones_like(x)
        r = x
        for _ in range(n - 1):
            r = r * x
        return r
    return x ** g  # TODO(synk): non-integer gamma falls back to exp/log on the EUP


def _focal_sum_kernel(pred_ref, gt_ref, out_ref, *,
                      gamma: float, eps: float, tile_rows: int,
                      inner_blocks: int, rows_valid: int, nb_full: int,
                      needs_mask: bool, binary_targets: bool):
    c = pl.program_id(0)   # core / parallel axis
    i = pl.program_id(1)   # reduction axis (arbitrary)

    @pl.when(i == 0)
    def _():
        out_ref[...] = jnp.zeros_like(out_ref)

    p = pred_ref[...].astype(jnp.float32)
    g = gt_ref[...].astype(jnp.float32)

    # clamp(pred, eps, 1 - eps)
    p = jnp.clip(p, eps, 1.0 - eps)
    omp = 1.0 - p

    if binary_targets:
        # gt in {0, 1}: probability of the true class -> one log, one pow.
        pt = jnp.where(g > 0.5, p, omp)
        loss = -jnp.log(pt) * _spec_pow(1.0 - pt, gamma)
    else:
        # loss1 = -gt     * log(p)   * (1-p)^gamma
        # loss2 = -(1-gt) * log(1-p) * p^gamma
        loss = (-g * jnp.log(p) * _spec_pow(omp, gamma)
                - (1.0 - g) * jnp.log(omp) * _spec_pow(p, gamma))

    def accumulate(x):
        # Vreg-shaped (8,128) partial sums: pure VPU adds, no cross-lane reduce.
        out_ref[0] += jnp.sum(x.reshape(tile_rows // 8, LANES // 16, LANES)
                              if False else
                              x.reshape(tile_rows // 8, 8, LANES), axis=0)

    if needs_mask:
        blk = c * inner_blocks + i          # unclamped global block index

        @pl.when(blk < nb_full)
        def _():                            # fully-valid block: unmasked hot path
            accumulate(loss)

        @pl.when(blk >= nb_full)
        def _():                            # ragged-tail / megacore-overrun block
            # Row-only compare: overflow-proof (no flat int32 element index).
            row = (lax.broadcasted_iota(jnp.int32, (tile_rows, LANES), 0)
                   + blk * tile_rows)
            # jnp.where applied AFTER the loss math so NaN/Inf from the
            # unspecified padded rows is squashed by the select.
            accumulate(jnp.where(row < rows_valid, loss, 0.0))
    else:
        accumulate(loss)


def binary_focal_loss(pred, gt, gamma: float = 2.0, eps: float = 1e-6, *,
                      binary_targets: bool = False, tile_rows=None):
    """Pallas TPU implementation of BinaryFocalLoss.forward (returns a scalar).

    `gt` may be passed in its producer-native dtype (bool/int8/bf16/f32); the
    kernel casts to f32 internally, so narrow gt halves its HBM traffic.
    """
    assert pred.shape == gt.shape
    n = int(pred.size)

    flat_pred = pred.reshape(-1)
    flat_gt = gt.reshape(-1)

    n_main = (n // LANES) * LANES
    rows = n_main // LANES

    # <128-element ragged tail handled in tiny plain-JAX glue (avoids a
    # jnp.pad full-array copy of both inputs for this memory-bound kernel).
    tail_sum = jnp.float32(0.0)
    if n_main < n:
        tp = jnp.clip(flat_pred[n_main:].astype(jnp.float32), eps, 1.0 - eps)
        tg = flat_gt[n_main:].astype(jnp.float32)
        if binary_targets:
            pt = jnp.where(tg > 0.5, tp, 1.0 - tp)
            tail = -jnp.log(pt) * _spec_pow(1.0 - pt, gamma)
        else:
            tail = (-tg * jnp.log(tp) * _spec_pow(1.0 - tp, gamma)
                    - (1.0 - tg) * jnp.log(1.0 - tp) * _spec_pow(tp, gamma))
        tail_sum = jnp.sum(tail)

    if rows == 0:
        return tail_sum / jnp.float32(n)

    pred2d = (flat_pred if n_main == n else flat_pred[:n_main]).reshape(rows, LANES)
    gt2d = (flat_gt if n_main == n else flat_gt[:n_main]).reshape(rows, LANES)

    if tile_rows is None:
        tile_rows = _default_tile_rows()
    tile_rows = max(8, min(int(tile_rows), ((rows + 7) // 8) * 8))
    tile_rows = (tile_rows // 8) * 8

    nb = pl.cdiv(rows, tile_rows)            # blocks covering the data
    ncores = 2 if nb >= 2 else 1             # v7x megacore; sequential on 1-TC chips
    inner = pl.cdiv(nb, ncores)
    scheduled = ncores * inner               # blocks actually visited by the grid
    nb_full = rows // tile_rows              # blocks whose every row is valid
    needs_mask = scheduled != nb_full        # ragged tail and/or overrun block

    last_blk = nb - 1
    if scheduled == nb:
        def idx_map(c, i):
            return (c * inner + i, 0)
    else:
        def idx_map(c, i):                   # clamp the duplicated overrun block
            return (jnp.minimum(c * inner + i, last_blk), 0)

    kernel = functools.partial(
        _focal_sum_kernel, gamma=float(gamma), eps=float(eps),
        tile_rows=int(tile_rows), inner_blocks=int(inner),
        rows_valid=int(rows), nb_full=int(nb_full),
        needs_mask=bool(needs_mask), binary_targets=bool(binary_targets))

    tile_spec = pl.BlockSpec((tile_rows, LANES), idx_map)

    partials = pl.pallas_call(
        kernel,
        out_shape=jax.ShapeDtypeStruct((ncores, 8, LANES), jnp.float32),
        grid_spec=pltpu.PrefetchScalarGridSpec(
            num_scalar_prefetch=0,
            grid=(ncores, inner),
            in_specs=[tile_spec, tile_spec],
            # Constant block index along the "arbitrary" axis -> stays
            # VMEM-resident and doubles as the accumulator (no scratch).
            out_specs=pl.BlockSpec((1, 8, LANES), lambda c, i: (c, 0, 0)),
        ),
        compiler_params=pltpu.CompilerParams(
            dimension_semantics=("parallel", "arbitrary")),
    )(pred2d, gt2d)

    # mean = (per-core lane/sublane partial sums + ragged tail) / N
    return (jnp.sum(partials) + tail_sum) / jnp.float32(n)


def _reference(pred, gt, gamma=2.0, eps=1e-6):
    p = jnp.clip(pred.astype(jnp.float32), eps, 1.0 - eps)
    g = gt.astype(jnp.float32)
    l1 = -g * jnp.log(p) * (1.0 - p) ** gamma
    l2 = -(1.0 - g) * jnp.log(1.0 - p) * p ** gamma
    return jnp.mean(l1 + l2)


if __name__ == "__main__":
    key = jax.random.PRNGKey(0)
    k1, k2 = jax.random.split(key)

    # NCHW inputs, as the segmentation loss expects: (batch, channels, H, W)
    shape = (2, 4, 16, 16)
    pred = jax.random.uniform(k1, shape, dtype=jnp.float32,
                              minval=0.0, maxval=1.0)
    gt = (jax.random.uniform(k2, shape, dtype=jnp.float32) > 0.5
          ).astype(jnp.float32)

    out = binary_focal_loss(pred, gt)
    out = jax.block_until_ready(out)

    ref = _reference(pred, gt)
    assert jnp.allclose(out, ref, rtol=1e-5, atol=1e-6), (out, ref)

    print("KERNEL_OK")
</pallas_src>

<mosaic_0001>
module attributes {stable_mosaic.version = 11 : i64} {
  func.func @_focal_sum_kernel(%arg0: i32, %arg1: i32, %arg2: memref<16x128xf32, #tpu.memory_space<vmem>>, %arg3: memref<16x128xf32, #tpu.memory_space<vmem>>, %arg4: memref<1x8x128xf32, #tpu.memory_space<vmem>>) attributes {dimension_semantics = [#tpu.dimension_semantics<parallel>, #tpu.dimension_semantics<arbitrary>], iteration_bounds = array<i64: 1, 1>, scalar_prefetch = 0 : i64, scratch_operands = 0 : i64, tpu.core_type = #tpu.core_type<tc>, window_params = [{transform_indices = @transform_0, window_bounds = array<i64: 16, 128>}, {transform_indices = @transform_1, window_bounds = array<i64: 16, 128>}, {transform_indices = @transform_2, window_bounds = array<i64: 1, 8, 128>}]} {
    %c0_i32 = arith.constant 0 : i32
    %0 = arith.cmpi eq, %arg1, %c0_i32 : i32
    %1 = arith.extui %0 : i1 to i32
    %c0_i32_0 = arith.constant 0 : i32
    %2 = arith.cmpi ne, %1, %c0_i32_0 : i32
    scf.if %2 {
      %cst_15 = arith.constant 0.000000e+00 : f32
      %32 = vector.broadcast %cst_15 : f32 to vector<1x8x128xf32>
      %c0_16 = arith.constant 0 : index
      %c0_17 = arith.constant 0 : index
      %c0_18 = arith.constant 0 : index
      %33 = vector.load %arg4[%c0_16, %c0_17, %c0_18] : memref<1x8x128xf32, #tpu.memory_space<vmem>>, vector<1x8x128xf32>
      tpu.vector_store %arg4[%c0_16, %c0_17, %c0_18], %32 {strides = array<i32>} : memref<1x8x128xf32, #tpu.memory_space<vmem>>, vector<1x8x128xf32>,
    } else {
    }
    %c0 = arith.constant 0 : index
    %c0_1 = arith.constant 0 : index
    %3 = vector.load %arg2[%c0, %c0_1] : memref<16x128xf32, #tpu.memory_space<vmem>>, vector<16x128xf32>
    %c0_2 = arith.constant 0 : index
    %c0_3 = arith.constant 0 : index
    %4 = vector.load %arg3[%c0_2, %c0_3] : memref<16x128xf32, #tpu.memory_space<vmem>>, vector<16x128xf32>
    %cst = arith.constant 9.99999997E-7 : f32
    %cst_4 = arith.constant 0.999998986 : f32
    %5 = vector.broadcast %cst : f32 to vector<16x128xf32>
    %6 = arith.maximumf %5, %3 : vector<16x128xf32>
    %7 = vector.broadcast %cst_4 : f32 to vector<16x128xf32>
    %8 = arith.minimumf %7, %6 : vector<16x128xf32>
    %cst_5 = arith.constant 1.000000e+00 : f32
    %9 = vector.broadcast %cst_5 : f32 to vector<16x128xf32>
    %10 = arith.subf %9, %8 : vector<16x128xf32>
    %cst_6 = arith.constant 0.000000e+00 : f32
    %11 = vector.broadcast %cst_6 : f32 to vector<16x128xf32>
    %12 = arith.subf %11, %4 : vector<16x128xf32>
    %13 = math.log %8 : vector<16x128xf32>
    %14 = arith.mulf %12, %13 : vector<16x128xf32>
    %15 = arith.mulf %10, %10 : vector<16x128xf32>
    %16 = arith.mulf %14, %15 : vector<16x128xf32>
    %cst_7 = arith.constant 1.000000e+00 : f32
    %17 = vector.broadcast %cst_7 : f32 to vector<16x128xf32>
    %18 = arith.subf %17, %4 : vector<16x128xf32>
    %19 = math.log %10 : vector<16x128xf32>
    %20 = arith.mulf %18, %19 : vector<16x128xf32>
    %21 = arith.mulf %8, %8 : vector<16x128xf32>
    %22 = arith.mulf %20, %21 : vector<16x128xf32>
    %23 = arith.subf %16, %22 : vector<16x128xf32>
    %c0_8 = arith.constant 0 : index
    %c0_9 = arith.constant 0 : index
    %c0_10 = arith.constant 0 : index
    %24 = vector.load %arg4[%c0_8, %c0_9, %c0_10] : memref<1x8x128xf32, #tpu.memory_space<vmem>>, vector<1x8x128xf32>
    %25 = vector.shape_cast %24 : vector<1x8x128xf32> to vector<8x128xf32>
    %26 = vector.shape_cast %23 : vector<16x128xf32> to vector<2x8x128xf32>
    %cst_11 = arith.constant dense<0.000000e+00> : vector<8x128xf32>
    %27 = vector.multi_reduction <add>, %26, %cst_11 [0] : vector<2x8x128xf32> to vector<8x128xf32>
    %28 = arith.addf %25, %27 : vector<8x128xf32>
    %c0_12 = arith.constant 0 : index
    %c0_13 = arith.constant 0 : index
    %c0_14 = arith.constant 0 : index
    %29 = vector.load %arg4[%c0_12, %c0_13, %c0_14] : memref<1x8x128xf32, #tpu.memory_space<vmem>>, vector<1x8x128xf32>
    %30 = vector.shape_cast %29 : vector<1x8x128xf32> to vector<8x128xf32>
    %31 = vector.shape_cast %28 : vector<8x128xf32> to vector<1x8x128xf32>
    tpu.vector_store %arg4[%c0_12, %c0_13, %c0_14], %31 {strides = array<i32>} : memref<1x8x128xf32, #tpu.memory_space<vmem>>, vector<1x8x128xf32>,
    return
  }
  func.func @transform_0(%arg0: i32, %arg1: i32) -> (i32, i32) {
    %c1_i32 = arith.constant 1 : i32
    %0 = arith.muli %arg0, %c1_i32 : i32
    %1 = arith.addi %0, %arg1 : i32
    %c0_i32 = arith.constant 0 : i32
    %c0_i32_0 = arith.constant 0 : i32
    return %1, %c0_i32 : i32, i32
  }
  func.func @transform_1(%arg0: i32, %arg1: i32) -> (i32, i32) {
    %c1_i32 = arith.constant 1 : i32
    %0 = arith.muli %arg0, %c1_i32 : i32
    %1 = arith.addi %0, %arg1 : i32
    %c0_i32 = arith.constant 0 : i32
    %c0_i32_0 = arith.constant 0 : i32
    return %1, %c0_i32 : i32, i32
  }
  func.func @transform_2(%arg0: i32, %arg1: i32) -> (i32, i32, i32) {
    %c0_i32 = arith.constant 0 : i32
    %c0_i32_0 = arith.constant 0 : i32
    %c0_i32_1 = arith.constant 0 : i32
    return %arg0, %c0_i32, %c0_i32_0 : i32, i32, i32
  }
}

</mosaic_0001>

<llo_original>
// kernel: tpu_custom_call.1
$region0: #{tpu_custom_call.1}
  #allocation0 [shape = 'u32[]', space=smem, size = 0x4, offset = 0x4, fixed_abs, tag = 'smem constant byte address 0x4 - core index']
  #allocation1 [shape = 'u32[72,128]{1,0:T(1,128)}', space=vmem, size = 0x9000, scoped, tag = 'internal scratch']
  %s0 = inlined_call_operand.hbm [shape: f32[16,128], index: 0, kind: input, shape index: {}]
  %s1 = inlined_call_operand.hbm [shape: f32[16,128], index: 1, kind: input, shape index: {}]
  %s2 = inlined_call_operand.hbm [shape: f32[1,8,128], index: 2, kind: output, shape index: {}]
  %s3 = sld [smem:[#allocation0]]
  $region30: #{tpu_custom_call.1} parent=0
    _
  %s5 = ssub.s32 1, %s3
  %s6 = scalar_select 0, %s5, %s3
  $region1: #{tpu_custom_call.1} parent=0
    #allocation2 [shape = 'u8[8192]{0}', space=vmem, size = 0x2000, scoped, tag = 'input window, operand 0, single buffered']
    #allocation3 [shape = 's32[1]{0}', space=sflag, size = 0x4, scoped, tag = 'scoped memory for tpu_custom_call.1']
    #allocation4 [shape = 's32[1]{0}', space=sflag, size = 0x4, scoped, tag = 'scoped memory for tpu_custom_call.1']
    #allocation5 [shape = 'u8[8192]{0}', space=vmem, size = 0x2000, scoped, tag = 'input window, operand 1, single buffered']
    #allocation6 [shape = 's32[1]{0}', space=sflag, size = 0x4, scoped, tag = 'scoped memory for tpu_custom_call.1']
    #allocation7 [shape = 'u8[4096]{0}', space=vmem, size = 0x1000, scoped, tag = 'output window, operand 0, single buffered']
    %7 = vsyncpa [#allocation3], 0
    %8 = vsyncpa [#allocation6], 0
    %9 = vsyncpa [#allocation4], 0
    // Predicated region
    $region2: #{tpu_custom_call.1} parent=1 // pred_check
      _
    $region3: #{tpu_custom_call.1} parent=1 // pred_check_branch
      %11 = sbr.rel (0) target = $region5
    $region4: #{tpu_custom_call.1} parent=1 // pred_region
      %s12 = sadd.s32 0, 0
      %s13 = smul.u32 2, %s12
      %15 = vsyncadd [#allocation3], 0
      %s16 = smul.addr %s13, 8
      %s17 = scalar_lea.hbm %s0, %s16
      %s18 = sshll.u32 %s17, 4
      %s19 = int_to_ptr.hbm [resolvable:$true] %s18
      %s20 = sshll.u32 [#allocation2], 4
      %s21 = int_to_ptr.vmem [resolvable:$true] %s20
      %26 = dma.hbm_to_vmem [thread:$0]  %s19, 256, %s21, [#allocation3], 128, 128, 8
    $region5: #{tpu_custom_call.1} parent=1 // pred_fallthru
      _
    // Predicated region
    $region6: #{tpu_custom_call.1} parent=1 // pred_check
      _
    $region7: #{tpu_custom_call.1} parent=1 // pred_check_branch
      %28 = sbr.rel (0) target = $region9
    $region8: #{tpu_custom_call.1} parent=1 // pred_region
      %s29 = sadd.s32 0, 0
      %s30 = smul.u32 2, %s29
      %32 = vsyncadd [#allocation6], 0
      %s33 = smul.addr %s30, 8
      %s34 = scalar_lea.hbm %s1, %s33
      %s35 = sshll.u32 %s34, 4
      %s36 = int_to_ptr.hbm [resolvable:$true] %s35
      %s37 = sshll.u32 [#allocation5], 4
      %s38 = int_to_ptr.vmem [resolvable:$true] %s37
      %43 = dma.hbm_to_vmem [thread:$0]  %s36, 256, %s38, [#allocation6], 128, 128, 8
    $region9: #{tpu_custom_call.1} parent=1 // pred_fallthru
      _
    // Predicated region
    $region10: #{tpu_custom_call.1} parent=1 // pred_check
      _
    $region11: #{tpu_custom_call.1} parent=1 // pred_check_branch
      %45 = sbr.rel (0) target = $region13
    $region12: #{tpu_custom_call.1} parent=1 // pred_region
      %47 = dma.done [#allocation3], 256
    $region13: #{tpu_custom_call.1} parent=1 // pred_fallthru
      _
    // Predicated region
    $region14: #{tpu_custom_call.1} parent=1 // pred_check
      _
    $region15: #{tpu_custom_call.1} parent=1 // pred_check_branch
      %49 = sbr.rel (0) target = $region17
    $region16: #{tpu_custom_call.1} parent=1 // pred_region
      %51 = dma.done [#allocation6], 256
    $region17: #{tpu_custom_call.1} parent=1 // pred_fallthru
      _
    %s52 = sadd.s32 0, 0
    %s53 = smul.u32 2, %s52
    %s54 = sadd.s32 0, 0
    %s55 = smul.u32 2, %s54
    %p56 = scmp.eq.s32.totalorder 0, 0
    // Predicated region
    $region18: #{tpu_custom_call.1} parent=1 // pred_check
      %p57 = pneg %p56
    $region19: #{tpu_custom_call.1} parent=1 // pred_check_branch
      %59 = sbr.rel (%p57) target = $region21
    $region20: #{tpu_custom_call.1} parent=1 // pred_region
      %60 = vst [vmem:[#allocation7] sm:$0xff] 0.0
    $region21: #{tpu_custom_call.1} parent=1 // pred_fallthru
      _
    %v61 = vld [vmem:[#allocation2] sm:$0xff]
    %v62 = vld [vmem:[#allocation2 + $0x8] sm:$0xff]
    %v63 = vld [vmem:[#allocation5] sm:$0xff]
    %v64 = vld [vmem:[#allocation5 + $0x8] sm:$0xff]
    %v65 = vmax.f32 %v61, 1e-06
    %v66 = vmax.f32 %v62, 1e-06
    %v67 = vmin.f32 %v65, 0.999999
    %v68 = vmin.f32 %v66, 0.999999
    %v69 = vsub.f32 1.0, %v67
    %v70 = vsub.f32 1.0, %v68
    %v71 = vsub.f32 0.0, %v63
    %v72 = vsub.f32 0.0, %v64
    %v73 = vlog2.pop %v67
    %v74 = vmul.f32 %v73, 0.6931472
    %v75 = vlog2.pop %v68
    %v76 = vmul.f32 %v75, 0.6931472
    %v77 = vmul.f32 %v71, %v74
    %v78 = vmul.f32 %v72, %v76
    %v79 = vmul.f32 %v69, %v69
    %v80 = vmul.f32 %v70, %v70
    %v81 = vmul.f32 %v77, %v79
    %v82 = vmul.f32 %v78, %v80
    %v83 = vsub.f32 1.0, %v63
    %v84 = vsub.f32 1.0, %v64
    %v85 = vlog2.pop %v69
    %v86 = vmul.f32 %v85, 0.6931472
    %v87 = vlog2.pop %v70
    %v88 = vmul.f32 %v87, 0.6931472
    %v89 = vmul.f32 %v83, %v86
    %v90 = vmul.f32 %v84, %v88
    %v91 = vmul.f32 %v67, %v67
    %v92 = vmul.f32 %v68, %v68
    %v93 = vmul.f32 %v89, %v91
    %v94 = vmul.f32 %v90, %v92
    %v95 = vsub.f32 %v81, %v93
    %v96 = vsub.f32 %v82, %v94
    %v97 = vld [vmem:[#allocation7] sm:$0xff]
    %v98 = vadd.f32 %v95, %v96
    %v99 = vadd.f32 %v97, %v98
    %100 = vst [vmem:[#allocation7] sm:$0xff] %v99
    // Predicated region
    $region22: #{tpu_custom_call.1} parent=1 // pred_check
      _
    $region23: #{tpu_custom_call.1} parent=1 // pred_check_branch
      %102 = sbr.rel (0) target = $region25
    $region24: #{tpu_custom_call.1} parent=1 // pred_region
      %104 = vsyncadd [#allocation4], 0
      %s106 = sshll.u32 [#allocation7], 4
      %s107 = int_to_ptr.vmem [resolvable:$true] %s106
      %s108 = sshll.u32 %s2, 4
      %s109 = int_to_ptr.hbm [resolvable:$true] %s108
      %111 = dma.vmem_to_hbm [thread:$0]  %s107, 128, %s109, [#allocation4]
    $region25: #{tpu_custom_call.1} parent=1 // pred_fallthru
      _
    // Predicated region
    $region26: #{tpu_custom_call.1} parent=1 // pred_check
      _
    $region27: #{tpu_custom_call.1} parent=1 // pred_check_branch
      %113 = sbr.rel (0) target = $region29
    $region28: #{tpu_custom_call.1} parent=1 // pred_region
      %115 = dma.done [#allocation4], 128
    $region29: #{tpu_custom_call.1} parent=1 // pred_fallthru
      _
    %116 = vsyncpa [#allocation3], 1
    %117 = vsyncpa [#allocation6], 1
    %118 = vsyncpa [#allocation4], 1

</llo_original>
